<compile_context>
chip_gen: v5e
topology: v5e:2x2
jax: 0.10.0
libtpu: 0.0.40
codegen_flags: <defaults>
</compile_context>

<pallas_src>
import functools

import jax
import jax.numpy as jnp
from jax.experimental import pallas as pl
from jax.experimental.pallas import tpu as pltpu  # noqa: F401 (kept for parity)

KH, KW = 3, 3
BN_EPS = 1e-5


def _round_up(x, m):
    return (x + m - 1) // m * m


def single_block_kernel(patches_ref, w_ref, gamma_ref, beta_ref, o_ref, *, inv_n):
    # patches_ref: [Kp, NHWp]   im2col of the padded input (zero-padded cols/rows)
    # w_ref:       [Cp, Kp]     conv weights, (kh, kw, cin) order on K
    # gamma_ref:   [Cp, 1]      BN weight
    # beta_ref:    [Cp, 1]      BN bias
    # o_ref:       [Cp, NHWp]   output, lane-dense along NHW
    # inv_n:       static 1.0 / (true N*H*W)

    # Conv2d(k=3, pad=1) as a single MXU matmul: [Cp,Kp] @ [Kp,NHWp] -> [Cp,NHWp]
    acc = jnp.dot(w_ref[...], patches_ref[...],
                  preferred_element_type=jnp.float32)

    # BatchNorm2d training-mode forward: per-channel batch statistics over the
    # lane (N,H,W) axis, biased variance, affine fused into scale/shift.
    # Padded lane columns of `acc` are exact zeros, so sums are unaffected and
    # dividing by the TRUE element count gives exact statistics.
    s1 = jnp.sum(acc, axis=1, keepdims=True) * inv_n            # mean     [Cp,1]
    s2 = jnp.sum(acc * acc, axis=1, keepdims=True) * inv_n      # E[x^2]   [Cp,1]
    var = s2 - s1 * s1                                          # biased var
    scale = gamma_ref[...] * jax.lax.rsqrt(var + BN_EPS)        # [Cp,1]
    shift = beta_ref[...] - s1 * scale                          # [Cp,1]

    # BN affine + ReLU.
    o_ref[...] = jnp.maximum(acc * scale + shift, 0.0).astype(o_ref.dtype)


def single_block(x_nchw, w_oihw, bias, gamma, beta):
    """SingleBlock forward. x_nchw: [N, Cin, H, W]. Returns [N, Cout, H, W].

    `bias` is accepted for API parity with nn.Conv2d but is NOT used: a
    per-channel constant bias is exactly cancelled by the training-mode BN
    mean subtraction, so dropping it preserves the module's forward output.
    """
    del bias  # mathematically a no-op before training-mode BatchNorm2d
    N, Cin, H, W = x_nchw.shape
    Cout = w_oihw.shape[0]
    NHW = N * H * W
    K = KH * KW * Cin

    # Padded sizes: lane-dense output (unmasked vst) + aligned sublane tiles.
    NHWp = _round_up(NHW, 128)
    Cp = _round_up(Cout, 8)
    Kp = _round_up(K, 8)

    # --- wrapper glue: layout, pad=1 halo, im2col, weight repack ------------
    x_nhwc = jnp.transpose(x_nchw, (0, 2, 3, 1)).astype(jnp.float32)
    x_pad = jnp.pad(x_nhwc, ((0, 0), (1, 1), (1, 1), (0, 0)))
    # im2col: rows ordered (kh, kw, cin); columns ordered (n, h, w).
    cols = []
    for kh in range(KH):
        for kw in range(KW):
            sl = x_pad[:, kh:kh + H, kw:kw + W, :]              # [N, H, W, Cin]
            cols.append(jnp.transpose(sl, (3, 0, 1, 2)).reshape(Cin, NHW))
    patches = jnp.concatenate(cols, axis=0)                     # [K, NHW]
    patches = jnp.pad(patches, ((0, Kp - K), (0, NHWp - NHW)))  # zeros -> exact BN

    # [Cout, Cin, KH, KW] -> [Cout, KH, KW, Cin] -> [Cout, K]  (same K order)
    w_packed = jnp.transpose(w_oihw, (0, 2, 3, 1)).reshape(Cout, K)
    w_packed = jnp.pad(w_packed.astype(jnp.float32),
                       ((0, Cp - Cout), (0, Kp - K)))
    g2 = jnp.pad(gamma.reshape(Cout, 1).astype(jnp.float32), ((0, Cp - Cout), (0, 0)),
                 constant_values=1.0)
    be2 = jnp.pad(beta.reshape(Cout, 1).astype(jnp.float32), ((0, Cp - Cout), (0, 0)))

    # Single grid step: total VMEM footprint at these shapes is tens of KB, so
    # no tiling and no vmem_limit override needed (plenty of headroom even on
    # v7x's 64 MiB VMEM).
    # TODO(synk): for non-toy shapes, add a grid over NHW tiles (parallel conv
    # pass accumulating BN sum/sumsq, then a finalize pass applying scale/shift).
    out_cm = pl.pallas_call(
        functools.partial(single_block_kernel, inv_n=1.0 / float(NHW)),
        out_shape=jax.ShapeDtypeStruct((Cp, NHWp), jnp.float32),
        in_specs=[
            pl.BlockSpec((Kp, NHWp), lambda: (0, 0)),
            pl.BlockSpec((Cp, Kp), lambda: (0, 0)),
            pl.BlockSpec((Cp, 1), lambda: (0, 0)),
            pl.BlockSpec((Cp, 1), lambda: (0, 0)),
        ],
        out_specs=pl.BlockSpec((Cp, NHWp), lambda: (0, 0)),
    )(patches, w_packed, g2, be2)

    # [Cp, NHWp] -> [Cout, N*H*W] -> [N, Cout, H, W]
    out_cm = out_cm[:Cout, :NHW]
    return jnp.transpose(out_cm.reshape(Cout, N, H, W), (1, 0, 2, 3))


def reference(x_nchw, w_oihw, bias, gamma, beta):
    """Pure-JAX reference (conv+bias + training-mode BN + relu)."""
    x_nhwc = jnp.transpose(x_nchw, (0, 2, 3, 1)).astype(jnp.float32)
    w_hwio = jnp.transpose(w_oihw, (2, 3, 1, 0)).astype(jnp.float32)
    y = jax.lax.conv_general_dilated(
        x_nhwc, w_hwio, window_strides=(1, 1), padding="SAME",
        dimension_numbers=("NHWC", "HWIO", "NHWC"))
    y = y + bias.reshape(1, 1, 1, -1)
    mean = jnp.mean(y, axis=(0, 1, 2), keepdims=True)
    var = jnp.mean((y - mean) ** 2, axis=(0, 1, 2), keepdims=True)
    y = (y - mean) * jax.lax.rsqrt(var + BN_EPS)
    y = y * gamma.reshape(1, 1, 1, -1) + beta.reshape(1, 1, 1, -1)
    y = jnp.maximum(y, 0.0)
    return jnp.transpose(y, (0, 3, 1, 2))


if __name__ == "__main__":
    N, Cin, Cout, H, W = 2, 4, 8, 16, 16

    key = jax.random.PRNGKey(0)
    kx, kw, kb = jax.random.split(key, 3)
    x = jax.random.normal(kx, (N, Cin, H, W), dtype=jnp.float32)
    # Deterministic synthetic parameters (shapes match nn.Conv2d / nn.BatchNorm2d).
    w = 0.1 * jax.random.normal(kw, (Cout, Cin, KH, KW), dtype=jnp.float32)
    b = 0.1 * jax.random.normal(kb, (Cout,), dtype=jnp.float32)
    gamma = jnp.ones((Cout,), dtype=jnp.float32)   # BN default weight
    beta = jnp.zeros((Cout,), dtype=jnp.float32)   # BN default bias

    out = jax.block_until_ready(single_block(x, w, b, gamma, beta))
    ref = jax.block_until_ready(reference(x, w, b, gamma, beta))

    assert out.shape == (N, Cout, H, W)
    assert jnp.allclose(out, ref, atol=1e-4, rtol=1e-4), \
        f"max abs err = {jnp.max(jnp.abs(out - ref))}"
    print("KERNEL_OK")
</pallas_src>

<mosaic_0001>
module attributes {stable_mosaic.version = 11 : i64} {
  func.func @single_block_kernel(%arg0: memref<40x512xf32, #tpu.memory_space<vmem>>, %arg1: memref<8x40xf32, #tpu.memory_space<vmem>>, %arg2: memref<8x1xf32, #tpu.memory_space<vmem>>, %arg3: memref<8x1xf32, #tpu.memory_space<vmem>>, %arg4: memref<8x512xf32, #tpu.memory_space<vmem>>) attributes {dimension_semantics = [], scalar_prefetch = 0 : i64, scratch_operands = 0 : i64, tpu.core_type = #tpu.core_type<tc>} {
    %c0 = arith.constant 0 : index
    %c0_0 = arith.constant 0 : index
    %0 = vector.load %arg1[%c0, %c0_0] : memref<8x40xf32, #tpu.memory_space<vmem>>, vector<8x40xf32>
    %c0_1 = arith.constant 0 : index
    %c0_2 = arith.constant 0 : index
    %1 = vector.load %arg0[%c0_1, %c0_2] : memref<40x512xf32, #tpu.memory_space<vmem>>, vector<40x512xf32>
    %cst = arith.constant dense<0.000000e+00> : vector<8x512xf32>
    %2 = tpu.matmul %0, %1, %cst {dimension_numbers = #tpu.dot_dimension_numbers<[1], [0], [0], [1], [0, 0, 1, 1], [], []>} : vector<8x40xf32>, vector<40x512xf32>, vector<8x512xf32> -> vector<8x512xf32>
    %cst_3 = arith.constant dense<0.000000e+00> : vector<8xf32>
    %3 = vector.multi_reduction <add>, %2, %cst_3 [1] : vector<8x512xf32> to vector<8xf32>
    %4 = vector.shape_cast %3 : vector<8xf32> to vector<8x1xf32>
    %cst_4 = arith.constant 0.001953125 : f32
    %5 = vector.broadcast %cst_4 : f32 to vector<8x1xf32>
    %6 = arith.mulf %4, %5 : vector<8x1xf32>
    %7 = arith.mulf %2, %2 : vector<8x512xf32>
    %cst_5 = arith.constant dense<0.000000e+00> : vector<8xf32>
    %8 = vector.multi_reduction <add>, %7, %cst_5 [1] : vector<8x512xf32> to vector<8xf32>
    %9 = vector.shape_cast %8 : vector<8xf32> to vector<8x1xf32>
    %cst_6 = arith.constant 0.001953125 : f32
    %10 = vector.broadcast %cst_6 : f32 to vector<8x1xf32>
    %11 = arith.mulf %9, %10 : vector<8x1xf32>
    %12 = arith.mulf %6, %6 : vector<8x1xf32>
    %13 = arith.subf %11, %12 : vector<8x1xf32>
    %c0_7 = arith.constant 0 : index
    %c0_8 = arith.constant 0 : index
    %14 = vector.load %arg2[%c0_7, %c0_8] : memref<8x1xf32, #tpu.memory_space<vmem>>, vector<8x1xf32>
    %cst_9 = arith.constant 9.99999974E-6 : f32
    %15 = vector.broadcast %cst_9 : f32 to vector<8x1xf32>
    %16 = arith.addf %13, %15 : vector<8x1xf32>
    %17 = math.rsqrt %16 : vector<8x1xf32>
    %18 = arith.mulf %14, %17 : vector<8x1xf32>
    %c0_10 = arith.constant 0 : index
    %c0_11 = arith.constant 0 : index
    %19 = vector.load %arg3[%c0_10, %c0_11] : memref<8x1xf32, #tpu.memory_space<vmem>>, vector<8x1xf32>
    %20 = arith.mulf %6, %18 : vector<8x1xf32>
    %21 = arith.subf %19, %20 : vector<8x1xf32>
    %22 = vector.broadcast %18 : vector<8x1xf32> to vector<8x512xf32>
    %23 = arith.mulf %2, %22 : vector<8x512xf32>
    %24 = vector.broadcast %21 : vector<8x1xf32> to vector<8x512xf32>
    %25 = arith.addf %23, %24 : vector<8x512xf32>
    %cst_12 = arith.constant 0.000000e+00 : f32
    %26 = vector.broadcast %cst_12 : f32 to vector<8x512xf32>
    %27 = arith.maximumf %25, %26 : vector<8x512xf32>
    %c0_13 = arith.constant 0 : index
    %c0_14 = arith.constant 0 : index
    %28 = vector.load %arg4[%c0_13, %c0_14] : memref<8x512xf32, #tpu.memory_space<vmem>>, vector<8x512xf32>
    tpu.vector_store %arg4[%c0_13, %c0_14], %27 {strides = array<i32>} : memref<8x512xf32, #tpu.memory_space<vmem>>, vector<8x512xf32>,
    return
  }
}

</mosaic_0001>

<llo_original>
// kernel: tpu_custom_call.1
$region0: #{tpu_custom_call.1}
  #allocation0 [shape = 'u32[]', space=smem, size = 0x4, offset = 0x4, fixed_abs, tag = 'smem constant byte address 0x4 - core index']
  #allocation1 [shape = 'u32[72,128]{1,0:T(1,128)}', space=vmem, size = 0x9000, scoped, tag = 'internal scratch']
  %s0 = inlined_call_operand.hbm [shape: f32[40,512], index: 0, kind: input, shape index: {}]
  %s1 = inlined_call_operand.vmem [shape: f32[8,40], index: 1, kind: input, shape index: {}]
  %s2 = inlined_call_operand.vmem [shape: f32[8,1], index: 2, kind: input, shape index: {}]
  %s3 = inlined_call_operand.vmem [shape: f32[8,1], index: 3, kind: input, shape index: {}]
  %s4 = inlined_call_operand.hbm [shape: f32[8,512], index: 4, kind: output, shape index: {}]
  %s5 = sld [smem:[#allocation0]]
  $region30: #{tpu_custom_call.1} parent=0
    _
  %s7 = ssub.s32 1, %s5
  %s8 = scalar_select 0, %s7, %s5
  $region1: #{tpu_custom_call.1} parent=0
    #allocation2 [shape = 'u8[81920]{0}', space=vmem, size = 0x14000, scoped, tag = 'input window, operand 0, single buffered']
    #allocation3 [shape = 's32[1]{0}', space=sflag, size = 0x4, scoped, tag = 'scoped memory for tpu_custom_call.1']
    #allocation4 [shape = 's32[1]{0}', space=sflag, size = 0x4, scoped, tag = 'scoped memory for tpu_custom_call.1']
    #allocation5 [shape = 'u8[16384]{0}', space=vmem, size = 0x4000, scoped, tag = 'output window, operand 0, single buffered']
    %9 = vsyncpa [#allocation3], 0
    %10 = vsyncpa [#allocation4], 0
    // Predicated region
    $region2: #{tpu_custom_call.1} parent=1 // pred_check
      _
    $region3: #{tpu_custom_call.1} parent=1 // pred_check_branch
      %12 = sbr.rel (0) target = $region5
    $region4: #{tpu_custom_call.1} parent=1 // pred_region
      %14 = vsyncadd [#allocation3], 0
      %s15 = sshll.u32 %s0, 4
      %s16 = int_to_ptr.hbm [resolvable:$true] %s15
      %s17 = sshll.u32 [#allocation2], 4
      %s18 = int_to_ptr.vmem [resolvable:$true] %s17
      %23 = dma.hbm_to_vmem [thread:$0]  %s16, 2560, %s18, [#allocation3], 512, 512, 32
    $region5: #{tpu_custom_call.1} parent=1 // pred_fallthru
      _
    // Predicated region
    $region6: #{tpu_custom_call.1} parent=1 // pred_check
      _
    $region7: #{tpu_custom_call.1} parent=1 // pred_check_branch
      %25 = sbr.rel (0) target = $region9
    $region8: #{tpu_custom_call.1} parent=1 // pred_region
      _
    $region9: #{tpu_custom_call.1} parent=1 // pred_fallthru
      _
    // Predicated region
    $region10: #{tpu_custom_call.1} parent=1 // pred_check
      _
    $region11: #{tpu_custom_call.1} parent=1 // pred_check_branch
      %27 = sbr.rel (0) target = $region13
    $region12: #{tpu_custom_call.1} parent=1 // pred_region
      _
    $region13: #{tpu_custom_call.1} parent=1 // pred_fallthru
      _
    // Predicated region
    $region14: #{tpu_custom_call.1} parent=1 // pred_check
      _
    $region15: #{tpu_custom_call.1} parent=1 // pred_check_branch
      %29 = sbr.rel (0) target = $region17
    $region16: #{tpu_custom_call.1} parent=1 // pred_region
      _
    $region17: #{tpu_custom_call.1} parent=1 // pred_fallthru
      _
    // Predicated region
    $region18: #{tpu_custom_call.1} parent=1 // pred_check
      _
    $region19: #{tpu_custom_call.1} parent=1 // pred_check_branch
      %31 = sbr.rel (0) target = $region21
    $region20: #{tpu_custom_call.1} parent=1 // pred_region
      %33 = dma.done [#allocation3], 2560
    $region21: #{tpu_custom_call.1} parent=1 // pred_fallthru
      _
    %v34 = vld [vmem:[%s1] sm:$0xff]
    %v35 = vld [vmem:[#allocation2] sm:$0xff]
    %v36 = vld [vmem:[#allocation2 + $0x8] sm:$0xff]
    %v37 = vld [vmem:[#allocation2 + $0x10] sm:$0xff]
    %v38 = vld [vmem:[#allocation2 + $0x18] sm:$0xff]
    %v39 = vld [vmem:[#allocation2 + $0x20] sm:$0xff]
    %v40 = vld [vmem:[#allocation2 + $0x28] sm:$0xff]
    %v41 = vld [vmem:[#allocation2 + $0x30] sm:$0xff]
    %v42 = vld [vmem:[#allocation2 + $0x38] sm:$0xff]
    %v43 = vld [vmem:[#allocation2 + $0x40] sm:$0xff]
    %v44 = vld [vmem:[#allocation2 + $0x48] sm:$0xff]
    %v45 = vld [vmem:[#allocation2 + $0x50] sm:$0xff]
    %v46 = vld [vmem:[#allocation2 + $0x58] sm:$0xff]
    %v47 = vld [vmem:[#allocation2 + $0x60] sm:$0xff]
    %v48 = vld [vmem:[#allocation2 + $0x68] sm:$0xff]
    %v49 = vld [vmem:[#allocation2 + $0x70] sm:$0xff]
    %v50 = vld [vmem:[#allocation2 + $0x78] sm:$0xff]
    %v51 = vld [vmem:[#allocation2 + $0x80] sm:$0xff]
    %v52 = vld [vmem:[#allocation2 + $0x88] sm:$0xff]
    %v53 = vld [vmem:[#allocation2 + $0x90] sm:$0xff]
    %v54 = vld [vmem:[#allocation2 + $0x98] sm:$0xff]
    %vm55 = vcmask 326656
    %v57 = vsel %vm55, %v34, 0
    %59 = vmatpush.msra.mxu0 0.0
    %60 = vmatpush.msra.mxu0 0.0
    %61 = vmatpush.msra.mxu0 0.0
    %62 = vmatpush.msra.mxu0 0.0
    %63 = vmatpush.msra.mxu0 0.0
    %64 = vmatpush.msra.mxu0 0.0
    %65 = vmatpush.msra.mxu0 0.0
    %66 = vmatpush.msra.mxu0 0.0
    %67 = vmatpush.msra.mxu0 0.0
    %68 = vmatpush.msra.mxu0 0.0
    %69 = vmatpush.msra.mxu0 0.0
    %70 = vmatpush.msra.mxu0 %v51
    %71 = vmatpush.msra.mxu0 %v47
    %72 = vmatpush.msra.mxu0 %v43
    %73 = vmatpush.msra.mxu0 %v39
    %74 = vmatpush.msra.mxu0 %v35
    %75 = vmatmul.f32.gmra.mxu0 %v57
    %v76 = vpop.f32.mrf.mxu0
    %v77 = vadd.f32 0.0, %v76
    %78 = vdwg.mxu0
    %79 = vmatpush.msra.mxu0 0.0
    %80 = vmatpush.msra.mxu0 0.0
    %81 = vmatpush.msra.mxu0 0.0
    %82 = vmatpush.msra.mxu0 0.0
    %83 = vmatpush.msra.mxu0 0.0
    %84 = vmatpush.msra.mxu0 0.0
    %85 = vmatpush.msra.mxu0 0.0
    %86 = vmatpush.msra.mxu0 0.0
    %87 = vmatpush.msra.mxu0 0.0
    %88 = vmatpush.msra.mxu0 0.0
    %89 = vmatpush.msra.mxu0 0.0
    %90 = vmatpush.msra.mxu0 %v52
    %91 = vmatpush.msra.mxu0 %v48
    %92 = vmatpush.msra.mxu0 %v44
    %93 = vmatpush.msra.mxu0 %v40
    %94 = vmatpush.msra.mxu0 %v36
    %95 = vmatmul.f32.gmra.mxu0 %v57
    %v96 = vpop.f32.mrf.mxu0
    %v97 = vadd.f32 0.0, %v96
    %98 = vdwg.mxu0
    %99 = vmatpush.msra.mxu0 0.0
    %100 = vmatpush.msra.mxu0 0.0
    %101 = vmatpush.msra.mxu0 0.0
    %102 = vmatpush.msra.mxu0 0.0
    %103 = vmatpush.msra.mxu0 0.0
    %104 = vmatpush.msra.mxu0 0.0
    %105 = vmatpush.msra.mxu0 0.0
    %106 = vmatpush.msra.mxu0 0.0
    %107 = vmatpush.msra.mxu0 0.0
    %108 = vmatpush.msra.mxu0 0.0
    %109 = vmatpush.msra.mxu0 0.0
    %110 = vmatpush.msra.mxu0 %v53
    %111 = vmatpush.msra.mxu0 %v49
    %112 = vmatpush.msra.mxu0 %v45
    %113 = vmatpush.msra.mxu0 %v41
    %114 = vmatpush.msra.mxu0 %v37
    %115 = vmatmul.f32.gmra.mxu0 %v57
    %v116 = vpop.f32.mrf.mxu0
    %v117 = vadd.f32 0.0, %v116
    %118 = vdwg.mxu0
    %119 = vmatpush.msra.mxu0 0.0
    %120 = vmatpush.msra.mxu0 0.0
    %121 = vmatpush.msra.mxu0 0.0
    %122 = vmatpush.msra.mxu0 0.0
    %123 = vmatpush.msra.mxu0 0.0
    %124 = vmatpush.msra.mxu0 0.0
    %125 = vmatpush.msra.mxu0 0.0
    %126 = vmatpush.msra.mxu0 0.0
    %127 = vmatpush.msra.mxu0 0.0
    %128 = vmatpush.msra.mxu0 0.0
    %129 = vmatpush.msra.mxu0 0.0
    %130 = vmatpush.msra.mxu0 %v54
    %131 = vmatpush.msra.mxu0 %v50
    %132 = vmatpush.msra.mxu0 %v46
    %133 = vmatpush.msra.mxu0 %v42
    %134 = vmatpush.msra.mxu0 %v38
    %135 = vmatmul.f32.gmra.mxu0 %v57
    %v136 = vpop.f32.mrf.mxu0
    %v137 = vadd.f32 0.0, %v136
    %138 = vdwg.mxu0
    %v139 = vadd.f32 %v77, %v97
    %v140 = vadd.f32 %v139, %v117
    %v141 = vadd.f32 %v140, %v137
    %142 = vadd.xlane.f32.xlu0 %v141
    %v143 = vpop.xlane.xlu0 %142
    %v144 = vmul.f32 %v143, 0.001953125
    %v145 = vmul.f32 %v77, %v77
    %v146 = vmul.f32 %v97, %v97
    %v147 = vmul.f32 %v117, %v117
    %v148 = vmul.f32 %v137, %v137
    %v149 = vadd.f32 %v145, %v146
    %v150 = vadd.f32 %v149, %v147
    %v151 = vadd.f32 %v150, %v148
    %152 = vadd.xlane.f32.xlu0 %v151
    %v153 = vpop.xlane.xlu0 %152
    %v154 = vmul.f32 %v153, 0.001953125
    %v155 = vmul.f32 %v144, %v144
    %v156 = vsub.f32 %v154, %v155
    %v157 = vld [vmem:[%s2] sm:$0xff]
    %v158 = vadd.f32 %v156, 1e-05
    %v159 = vrsqrt.pop %v158
    %v160 = vmul.f32 %v159, %v158
    %v161 = vmul.f32 %v160, %v159
    %v162 = vmul.f32 0.5, %v161
    %v163 = vsub.f32 1.5, %v162
    %v164 = vmul.f32 %v159, %v163
    %vm165 = vweird.f32 %v158
    %vm166 = vweird.f32 %v159
    %vm167 = vmor %vm165, %vm166
    %v168 = vsel %vm167, %v159, %v164
    %v169 = vmul.f32 %v157, %v168
    %v170 = vld [vmem:[%s3] sm:$0xff]
    %v171 = vmul.f32 %v144, %v169
    %v172 = vsub.f32 %v170, %v171
    %174 = vset.pattern.permute.xlu0 0
    %175 = vperm.xlu0 %174, %v169
    %v176 = vpop.permute.xlu0 %175
    %v178 = vmul.f32 %v77, %v176
    %v179 = vmul.f32 %v97, %v176
    %v180 = vmul.f32 %v117, %v176
    %v181 = vmul.f32 %v137, %v176
    %183 = vset.pattern.permute.xlu0 0
    %184 = vperm.xlu0 %183, %v172
    %v185 = vpop.permute.xlu0 %184
    %v187 = vadd.f32 %v178, %v185
    %v188 = vadd.f32 %v179, %v185
    %v189 = vadd.f32 %v180, %v185
    %v190 = vadd.f32 %v181, %v185
    %v191 = vmax.f32 %v187, 0.0
    %v192 = vmax.f32 %v188, 0.0
    %v193 = vmax.f32 %v189, 0.0
    %v194 = vmax.f32 %v190, 0.0
    %195 = vst [vmem:[#allocation5] sm:$0xff] %v191
    %196 = vst [vmem:[#allocation5 + $0x8] sm:$0xff] %v192
    %197 = vst [vmem:[#allocation5 + $0x10] sm:$0xff] %v193
    %198 = vst [vmem:[#allocation5 + $0x18] sm:$0xff] %v194
    // Predicated region
    $region22: #{tpu_custom_call.1} parent=1 // pred_check
      _
    $region23: #{tpu_custom_call.1} parent=1 // pred_check_branch
      %200 = sbr.rel (0) target = $region25
    $region24: #{tpu_custom_call.1} parent=1 // pred_region
      %202 = vsyncadd [#allocation4], 0
      %s204 = sshll.u32 [#allocation5], 4
      %s205 = int_to_ptr.vmem [resolvable:$true] %s204
      %s206 = sshll.u32 %s4, 4
      %s207 = int_to_ptr.hbm [resolvable:$true] %s206
      %209 = dma.vmem_to_hbm [thread:$0]  %s205, 512, %s207, [#allocation4]
    $region25: #{tpu_custom_call.1} parent=1 // pred_fallthru
      _
    // Predicated region
    $region26: #{tpu_custom_call.1} parent=1 // pred_check
      _
    $region27: #{tpu_custom_call.1} parent=1 // pred_check_branch
      %211 = sbr.rel (0) target = $region29
    $region28: #{tpu_custom_call.1} parent=1 // pred_region
      %213 = dma.done [#allocation4], 512
    $region29: #{tpu_custom_call.1} parent=1 // pred_fallthru
      _
    %214 = vsyncpa [#allocation3], 1
    %215 = vsyncpa [#allocation4], 1

</llo_original>
